<compile_context>
chip_gen: v7x
topology: tpu7x:2x2x1
jax: 0.10.0
libtpu: 0.0.40
codegen_flags: <defaults>
</compile_context>

<pallas_src>
import functools

import jax
import jax.numpy as jnp
from jax.experimental import pallas as pl
from jax.experimental.pallas import tpu as pltpu

EPS = 1e-6


def _int_pow(x, n):
    """x ** n for a small static positive integer n via multiplies (VPU only)."""
    result = None
    base = x
    while n > 0:
        if n & 1:
            result = base if result is None else result * base
        n >>= 1
        if n:
            base = base * base
    return result


def gem_kernel(p_ref, x_ref, o_ref, acc_ref, *, inv_spatial, spatial, ts, static_p):
    # p_ref:   (1,) scalar parameter in SMEM (scalar prefetch)
    # x_ref:   (TR, TS) input tile in VMEM
    # o_ref:   (TR, 1) output tile in VMEM (resident across the reduction axis)
    # acc_ref: (TR, 1) f32 running sum of clamp(x, eps)**p over the spatial axis
    k = pl.program_id(1)

    @pl.when(k == 0)
    def _init():
        acc_ref[...] = jnp.zeros_like(acc_ref)

    x = x_ref[...].astype(jnp.float32)
    xc = jnp.maximum(x, EPS)                       # clamp(min=eps): strictly > 0
    if static_p is not None:
        # Integer-p fast path (p known at trace time, e.g. the common p=3
        # default): exponentiation by squaring on the VPU; no EUP work in the
        # hot loop (the EUP is the binding slot on v7x / bf16-on-v6e).
        xp = _int_pow(xc, static_p)
    else:
        # Generic runtime p: one log + one exp per element on the EUP.
        # TODO(synk): optionally run log/exp at bf16 on v6e/v7x for ~2x EUP
        # throughput at a precision cost.
        xp = jnp.exp(p_ref[0] * jnp.log(xc))

    if spatial % ts != 0:
        # Last spatial block is partial: zero the out-of-range lanes (undefined
        # padded data) before the sum.  For non-last blocks the mask is all-true.
        lane = jax.lax.broadcasted_iota(jnp.int32, xp.shape, 1)
        xp = jnp.where(lane < (spatial - k * ts), xp, 0.0)

    acc_ref[...] += jnp.sum(xp, axis=-1, keepdims=True)

    @pl.when(k == pl.num_programs(1) - 1)
    def _finalize():
        p = p_ref[0]
        m = acc_ref[...] * inv_spatial             # mean over H*W
        # For very large p, eps**p may underflow to 0 (log -> -inf, result 0);
        # the pure-JAX / PyTorch reference behaves the same way.
        o_ref[...] = jnp.exp(jnp.log(m) * (1.0 / p)).astype(o_ref.dtype)


def _round_up(v, m):
    return (v + m - 1) // m * m


def _tpu_budgets():
    """Generation-aware per-input-tile byte budget and scoped-VMEM limit."""
    vmem_cap = 64 << 20                            # conservative default (v7x-sized)
    try:
        vmem_cap = int(pltpu.get_tpu_info().vmem_capacity_bytes)
    except Exception:
        pass
    if vmem_cap >= (128 << 20):                    # v5e / v6e: 128 MiB VMEM, 1 TC
        tile_budget = 16 << 20
        vmem_limit = 64 << 20
        two_tc = False
    else:                                          # v7x (64 MiB VMEM, 2 TCs) or unknown
        tile_budget = 10 << 20
        vmem_limit = min(48 << 20, vmem_cap * 3 // 4)
        two_tc = True
    return tile_budget, vmem_limit, two_tc


def _choose_tiles(R, S, itemsize, tile_budget, two_tc):
    """Pick (TR, TS).

    TS: whole spatial extent if a sublane's worth of rows fits the budget,
        else the largest 128-multiple divisor of S that fits (exact, no mask),
        else the largest budget-fitting 128-multiple (last block tail-masked).
    TR: as many rows as the byte budget allows (no artificial cap), rounded to
        the sublane packing; on 2-TC chips capped so the parallel axis has
        >= 2 blocks (both TensorCores get work).
    """
    sublane = max(8, 8 * (4 // max(itemsize, 1)))  # f32: 8, bf16: 16, int8/fp8: 32
    r_pad = _round_up(R, sublane)

    if sublane * S * itemsize <= tile_budget:
        ts = S                                     # single reduction step
    else:
        ts = None
        for cand in range((S // 128) * 128, 0, -128):
            if S % cand == 0 and sublane * cand * itemsize <= tile_budget:
                ts = cand
                break
        if ts is None:
            fit = (tile_budget // (sublane * itemsize)) // 128 * 128
            ts = max(min(fit, (S // 128) * 128), 128)

    tr = (tile_budget // (ts * itemsize)) // sublane * sublane
    tr = max(min(tr, r_pad), sublane)
    if two_tc and r_pad > sublane:
        tr = min(tr, _round_up(pl.cdiv(R, 2), sublane))
    return tr, ts


def gem(x, p):
    """GeM pooling. x: (N, C, H, W), p: (1,) float32 -> (N, C, 1, 1)."""
    N, C, H, W = x.shape
    R, S = N * C, H * W
    xf = x.reshape(R, S)                           # native dtype; upcast in-kernel

    itemsize = xf.dtype.itemsize
    tile_budget, vmem_limit, two_tc = _tpu_budgets()
    TR, TS = _choose_tiles(R, S, itemsize, tile_budget, two_tc)
    grid = (pl.cdiv(R, TR), pl.cdiv(S, TS))

    # Static fast path when p is a concrete small positive integer (e.g. the
    # common p=3 default): removes the per-element log/exp from the hot loop.
    static_p = None
    try:
        pv = float(p[0])
        if pv > 0 and pv == int(pv) and int(pv) <= 8:
            static_p = int(pv)
    except Exception:                              # tracer / abstract value under jit
        static_p = None

    kernel = functools.partial(
        gem_kernel, inv_spatial=1.0 / float(S), spatial=S, ts=TS, static_p=static_p)

    in_spec = pl.BlockSpec((TR, TS), lambda i, k, p_ref: (i, k))
    if TR * TS * itemsize < (1 << 20) and grid[0] * grid[1] >= 3:
        # Tiny tiles + multi-step grid: deepen buffering to hide DMA issue latency.
        in_spec = pl.BlockSpec((TR, TS), lambda i, k, p_ref: (i, k),
                               pipeline_mode=pl.Buffered(3))

    # Padded rows of the last row-tile (R % TR != 0) run the math on undefined
    # VMEM data, but those rows never reach HBM (out-of-bounds block writes are
    # dropped), so they are benign.
    # TODO(synk): a lane-dense output slab (pack results as (R/128, 128)) would
    # avoid masked (TR, 1) stores; output traffic is tiny so kept simple.
    out = pl.pallas_call(
        kernel,
        out_shape=jax.ShapeDtypeStruct((R, 1), x.dtype),
        grid_spec=pltpu.PrefetchScalarGridSpec(
            num_scalar_prefetch=1,                 # p lives in SMEM
            grid=grid,
            in_specs=[in_spec],
            out_specs=pl.BlockSpec((TR, 1), lambda i, k, p_ref: (i, 0)),
            scratch_shapes=[pltpu.VMEM((TR, 1), jnp.float32)],
        ),
        compiler_params=pltpu.CompilerParams(
            dimension_semantics=("parallel", "arbitrary"),
            vmem_limit_bytes=vmem_limit,
        ),
        cost_estimate=pl.CostEstimate(
            flops=(2 + (static_p or 2)) * R * S,
            transcendentals=(0 if static_p is not None else 2 * R * S) + 2 * R,
            bytes_accessed=R * S * itemsize + R * itemsize,
        ),
    )(p, xf)
    return out.reshape(N, C, 1, 1)


def gem_ref(x, p):
    # pure-JAX reference mirroring the PyTorch module
    pv = p[0]
    xc = jnp.maximum(x, EPS)
    pooled = jnp.mean(xc ** pv, axis=(-2, -1), keepdims=True)
    return pooled ** (1.0 / pv)


if __name__ == "__main__":
    key = jax.random.PRNGKey(0)
    N, C, H, W = 2, 4, 16, 16
    x = jax.random.uniform(key, (N, C, H, W), dtype=jnp.float32)

    # deterministic parameter init: p = ones(1) * 3.0  (common GeM default)
    p = jnp.ones((1,), dtype=jnp.float32) * 3.0

    y = jax.block_until_ready(gem(x, p))

    y_ref = gem_ref(x, p)
    assert y.shape == (N, C, 1, 1)
    assert jnp.allclose(y, y_ref, rtol=1e-5, atol=1e-5), (
        f"max abs err {jnp.max(jnp.abs(y - y_ref))}"
    )
    print("KERNEL_OK")
</pallas_src>

<mosaic_0001>
module attributes {stable_mosaic.version = 11 : i64} {
  func.func @gem_kernel(%arg0: i32, %arg1: i32, %arg2: memref<1xf32, #tpu.memory_space<smem>>, %arg3: memref<8x256xf32, #tpu.memory_space<vmem>>, %arg4: memref<8x1xf32, #tpu.memory_space<vmem>>, %arg5: memref<8x1xf32, #tpu.memory_space<vmem>>) attributes {dimension_semantics = [#tpu.dimension_semantics<parallel>, #tpu.dimension_semantics<arbitrary>], iteration_bounds = array<i64: 1, 1>, scalar_prefetch = 1 : i64, scratch_operands = 1 : i64, tpu.core_type = #tpu.core_type<tc>, window_params = [{transform_indices = @transform_0, window_bounds = array<i64: 8, 256>}, {transform_indices = @transform_1, window_bounds = array<i64: 8, 1>}]} {
    %c0_i32 = arith.constant 0 : i32
    %0 = arith.cmpi eq, %arg1, %c0_i32 : i32
    %1 = arith.extui %0 : i1 to i32
    %c0_i32_0 = arith.constant 0 : i32
    %2 = arith.cmpi ne, %1, %c0_i32_0 : i32
    scf.if %2 {
      %cst_9 = arith.constant 0.000000e+00 : f32
      %16 = vector.broadcast %cst_9 : f32 to vector<8x1xf32>
      %c0_10 = arith.constant 0 : index
      %c0_11 = arith.constant 0 : index
      %17 = vector.load %arg5[%c0_10, %c0_11] : memref<8x1xf32, #tpu.memory_space<vmem>>, vector<8x1xf32>
      tpu.vector_store %arg5[%c0_10, %c0_11], %16 {strides = array<i32>} : memref<8x1xf32, #tpu.memory_space<vmem>>, vector<8x1xf32>,
    } else {
    }
    %c0 = arith.constant 0 : index
    %c0_1 = arith.constant 0 : index
    %3 = vector.load %arg3[%c0, %c0_1] : memref<8x256xf32, #tpu.memory_space<vmem>>, vector<8x256xf32>
    %cst = arith.constant 9.99999997E-7 : f32
    %4 = vector.broadcast %cst : f32 to vector<8x256xf32>
    %5 = arith.maximumf %3, %4 : vector<8x256xf32>
    %6 = arith.mulf %5, %5 : vector<8x256xf32>
    %7 = arith.mulf %5, %6 : vector<8x256xf32>
    %c0_2 = arith.constant 0 : index
    %c0_3 = arith.constant 0 : index
    %8 = vector.load %arg5[%c0_2, %c0_3] : memref<8x1xf32, #tpu.memory_space<vmem>>, vector<8x1xf32>
    %cst_4 = arith.constant dense<0.000000e+00> : vector<8xf32>
    %9 = vector.multi_reduction <add>, %7, %cst_4 [1] : vector<8x256xf32> to vector<8xf32>
    %10 = vector.shape_cast %9 : vector<8xf32> to vector<8x1xf32>
    %11 = arith.addf %8, %10 : vector<8x1xf32>
    %c0_5 = arith.constant 0 : index
    %c0_6 = arith.constant 0 : index
    %12 = vector.load %arg5[%c0_5, %c0_6] : memref<8x1xf32, #tpu.memory_space<vmem>>, vector<8x1xf32>
    tpu.vector_store %arg5[%c0_5, %c0_6], %11 {strides = array<i32>} : memref<8x1xf32, #tpu.memory_space<vmem>>, vector<8x1xf32>,
    %c0_i32_7 = arith.constant 0 : i32
    %13 = arith.cmpi eq, %arg1, %c0_i32_7 : i32
    %14 = arith.extui %13 : i1 to i32
    %c0_i32_8 = arith.constant 0 : i32
    %15 = arith.cmpi ne, %14, %c0_i32_8 : i32
    scf.if %15 {
      %c0_9 = arith.constant 0 : index
      %16 = memref.load %arg2[%c0_9] : memref<1xf32, #tpu.memory_space<smem>>
      %c0_10 = arith.constant 0 : index
      %c0_11 = arith.constant 0 : index
      %17 = vector.load %arg5[%c0_10, %c0_11] : memref<8x1xf32, #tpu.memory_space<vmem>>, vector<8x1xf32>
      %cst_12 = arith.constant 3.906250e-03 : f32
      %18 = vector.broadcast %cst_12 : f32 to vector<8x1xf32>
      %19 = arith.mulf %17, %18 : vector<8x1xf32>
      %20 = math.log %19 : vector<8x1xf32>
      %cst_13 = arith.constant 1.000000e+00 : f32
      %21 = arith.divf %cst_13, %16 : f32
      %22 = vector.broadcast %21 : f32 to vector<8x1xf32>
      %23 = arith.mulf %20, %22 : vector<8x1xf32>
      %24 = math.exp %23 : vector<8x1xf32>
      %c0_14 = arith.constant 0 : index
      %c0_15 = arith.constant 0 : index
      %25 = vector.load %arg4[%c0_14, %c0_15] : memref<8x1xf32, #tpu.memory_space<vmem>>, vector<8x1xf32>
      tpu.vector_store %arg4[%c0_14, %c0_15], %24 {strides = array<i32>} : memref<8x1xf32, #tpu.memory_space<vmem>>, vector<8x1xf32>,
    } else {
    }
    return
  }
  func.func @transform_0(%arg0: i32, %arg1: i32, %arg2: memref<1xf32, #tpu.memory_space<smem>>) -> (i32, i32) {
    %c0_i32 = arith.constant 0 : i32
    return %arg0, %arg1 : i32, i32
  }
  func.func @transform_1(%arg0: i32, %arg1: i32, %arg2: memref<1xf32, #tpu.memory_space<smem>>) -> (i32, i32) {
    %c0_i32 = arith.constant 0 : i32
    %c0_i32_0 = arith.constant 0 : i32
    return %arg0, %c0_i32 : i32, i32
  }
}

</mosaic_0001>

<llo_original>
// kernel: tpu_custom_call.1
$region0: #{tpu_custom_call.1}
  #allocation0 [shape = 'u32[]', space=smem, size = 0x4, offset = 0x4, fixed_abs, tag = 'smem constant byte address 0x4 - core index']
  #allocation1 [shape = 'u32[144,128]{1,0:T(1,128)}', space=vmem, size = 0x12000, scoped, tag = 'internal scratch']
  #allocation2 [shape = 'f32[8,1]{1,0:T(8,128)}', space=vmem, size = 0x1000, scoped, tag = 'scratch operand']
  #allocation3 [shape = 's32[1]{0}', space=sflag, size = 0x4, scoped, tag = 'scoped memory for tpu_custom_call.1']
  #allocation4 [shape = 'f32[1]{0:T(128)S(6)}', space=smem, size = 0x200, scoped, tag = 'prefetched SMEM operand 0']
  %s0 = inlined_call_operand.<no memory space> [shape: f32[1], index: 0, kind: input, shape index: {}]
  %s1 = inlined_call_operand.hbm [shape: f32[8,256], index: 1, kind: input, shape index: {}]
  %s2 = inlined_call_operand.vmem [shape: f32[8,1], index: 2, kind: output, shape index: {}]
  %s3 = sld [smem:[#allocation0]]
  $region26: #{tpu_custom_call.1} parent=0
    _
  %s5 = ssub.s32 1, %s3
  %s6 = scalar_select 0, %s5, %s3
  %7 = sst [smem:[#allocation4]] %s0
  $region1: #{tpu_custom_call.1} parent=0
    #allocation5 [shape = 'u8[8192]{0}', space=vmem, size = 0x2000, scoped, tag = 'input window, operand 1, single buffered']
    #allocation6 [shape = 's32[1]{0}', space=sflag, size = 0x4, scoped, tag = 'scoped memory for tpu_custom_call.1']
    %8 = vsyncpa [#allocation6], 0
    // Predicated region
    $region2: #{tpu_custom_call.1} parent=1 // pred_check
      _
    $region3: #{tpu_custom_call.1} parent=1 // pred_check_branch
      %10 = sbr.rel (0) target = $region5
    $region4: #{tpu_custom_call.1} parent=1 // pred_region
      %s12 = ssub.s32 256, 256
      %13 = vsyncadd [#allocation6], %s12
      %s15 = sshll.u32 [#allocation5], 4
      %s16 = int_to_ptr.vmem [resolvable:$true] %s15
      %18 = dma.hbm_to_vmem [thread:$0]  %s1, 256, %s16, [#allocation6]
    $region5: #{tpu_custom_call.1} parent=1 // pred_fallthru
      _
    // Predicated region
    $region6: #{tpu_custom_call.1} parent=1 // pred_check
      _
    $region7: #{tpu_custom_call.1} parent=1 // pred_check_branch
      %20 = sbr.rel (0) target = $region9
    $region8: #{tpu_custom_call.1} parent=1 // pred_region
      %21 = dma.done [#allocation6], 256
    $region9: #{tpu_custom_call.1} parent=1 // pred_fallthru
      _
    %p22 = scmp.eq.s32.totalorder 0, 0
    // Predicated region
    $region10: #{tpu_custom_call.1} parent=1 // pred_check
      %p23 = pneg %p22
    $region11: #{tpu_custom_call.1} parent=1 // pred_check_branch
      %25 = sbr.rel (%p23) target = $region13
    $region12: #{tpu_custom_call.1} parent=1 // pred_region
      %vm26 = vcmask 7168
      %27 = vst.msk [vmem:[#allocation2] sm:$0xff] %vm26, 0.0
    $region13: #{tpu_custom_call.1} parent=1 // pred_fallthru
      _
    %v28 = vld [vmem:[#allocation5] sm:$0xff]
    %v29 = vld [vmem:[#allocation5 + $0x8] sm:$0xff]
    %v30 = vmax.f32 %v28, 1e-06
    %v31 = vmax.f32 %v29, 1e-06
    %v32 = vmul.f32 %v30, %v30
    %v33 = vmul.f32 %v31, %v31
    %v34 = vmul.f32 %v30, %v32
    %v35 = vmul.f32 %v31, %v33
    %v36 = vld [vmem:[#allocation2] sm:$0xff]
    %v37 = vadd.f32 %v34, %v35
    %38 = vadd.xlane.f32.xlu0 %v37
    %v39 = vpop.xlane.xlu0 %38
    %v40 = vadd.f32 %v36, %v39
    %vm41 = vcmask 7168
    %42 = vst.msk [vmem:[#allocation2] sm:$0xff] %vm41, %v40
    // Predicated region
    $region14: #{tpu_custom_call.1} parent=1 // pred_check
      %p43 = pneg %p22
    $region15: #{tpu_custom_call.1} parent=1 // pred_check_branch
      %45 = sbr.rel (%p43) target = $region17
    $region16: #{tpu_custom_call.1} parent=1 // pred_region
      %s46 = sld [smem:[#allocation4]]
      %v47 = vld [vmem:[#allocation2] sm:$0xff]
      %v48 = vmul.f32 %v47, 0.00390625
      %v49 = vlog2.pop %v48
      %v50 = vmul.f32 %v49, 0.6931472
      %v51 = vstv %s46
      %v52 = vrcp.pop %v51
      %s53 = vtos %v52
      %v54 = vstv %s53
      %v55 = vmul.f32 %v50, %v54
      %v56 = vmul.f32 %v55, 1.442695
      %v57 = vpow.pop %v56
      %58 = vst.msk [vmem:[%s2] sm:$0xff] %vm41, %v57
    $region17: #{tpu_custom_call.1} parent=1 // pred_fallthru
      _
    // Predicated region
    $region18: #{tpu_custom_call.1} parent=1 // pred_check
      _
    $region19: #{tpu_custom_call.1} parent=1 // pred_check_branch
      %60 = sbr.rel (0) target = $region21
    $region20: #{tpu_custom_call.1} parent=1 // pred_region
      _
    $region21: #{tpu_custom_call.1} parent=1 // pred_fallthru
      _
    // Predicated region
    $region22: #{tpu_custom_call.1} parent=1 // pred_check
      _
    $region23: #{tpu_custom_call.1} parent=1 // pred_check_branch
      %62 = sbr.rel (0) target = $region25
    $region24: #{tpu_custom_call.1} parent=1 // pred_region
      _
    $region25: #{tpu_custom_call.1} parent=1 // pred_fallthru
      _
    %63 = vsyncpa [#allocation6], 1

</llo_original>
